<compile_context>
chip_gen: v7x
topology: tpu7x:2x2x1
jax: 0.10.0
libtpu: 0.0.40
codegen_flags: <defaults>
</compile_context>

<pallas_src>
import functools

import jax
import jax.numpy as jnp
import numpy as np
from jax.experimental import pallas as pl
from jax.experimental.pallas import tpu as pltpu

_LANE = 128
_CHUNK_BYTES = 4 * 1024 * 1024   # target bytes per DMA chunk (several in flight)
_MAX_CHUNKS = 8                  # cap on concurrent DMA descriptors / semaphores
_MAX_W = 64 * 1024               # cap on flat row width (elements)


def channel_reshape(x: jax.Array, size):
    """Metadata-only equivalent of Channel(size).forward(x) (preferred path)."""
    return x.reshape((x.shape[0],) + tuple(int(s) for s in size))


def _memcpy_kernel(x_hbm, o_hbm, sems, *, rows, chunk_rows, num_chunks):
    # Flat HBM->HBM memcpy: start every chunk's DMA first, then wait for all,
    # keeping several transfers in flight on the DMA engines simultaneously.
    # All indices are static Python ints, so every slice is a static window.
    copies = []
    for c in range(num_chunks):
        start = c * chunk_rows
        size = min(chunk_rows, rows - start)
        cp = pltpu.make_async_copy(
            x_hbm.at[pl.ds(start, size)],
            o_hbm.at[pl.ds(start, size)],
            sems.at[c],
        )
        cp.start()
        copies.append(cp)
    for cp in copies:
        cp.wait()


def _pick_flat_shape(total: int):
    """Pick a lane-dense row width W dividing `total` (requires total % 128 == 0)."""
    w = _LANE
    # Grow W while it still divides the total, keeps enough rows to chunk over,
    # and stays at a modest per-row size.
    while total % (w * 2) == 0 and total // (w * 2) >= 8 and w * 2 <= _MAX_W:
        w *= 2
    return total // w, w


@functools.partial(jax.jit, static_argnames=("size",))
def channel_forward(x: jax.Array, size):
    """Pallas-backed Channel(size).forward(x): materializes x.view([bs] + size)."""
    size = tuple(int(s) for s in size)
    bs = x.shape[0]
    n = int(np.prod(x.shape[1:])) if x.ndim > 1 else 1
    assert n == int(np.prod(size)), (
        f"cannot view {x.shape} as [{bs}] + {list(size)}: element count mismatch"
    )

    total = bs * n
    itemsize = np.dtype(x.dtype).itemsize
    total_bytes = total * itemsize

    # A view onto a contiguous target is metadata-only; if the total element
    # count is not lane-aligned (or the array is empty) a copy kernel would
    # only add masked partial DMAs, so defer to XLA's zero-cost reshape.
    if total == 0 or total % _LANE != 0:
        return channel_reshape(x, size)

    # Flatten the whole array (row-major, matches torch.view on contiguous
    # input) into a lane-dense (rows, w) slab -- metadata only.
    rows, w = _pick_flat_shape(total)
    x_flat = x.reshape(rows, w)

    # Split the copy into a few large chunks so multiple DMAs are outstanding.
    num_chunks = max(1, min(_MAX_CHUNKS, rows, -(-total_bytes // _CHUNK_BYTES)))
    chunk_rows = -(-rows // num_chunks)
    num_chunks = -(-rows // chunk_rows)

    out_flat = pl.pallas_call(
        functools.partial(
            _memcpy_kernel, rows=rows, chunk_rows=chunk_rows, num_chunks=num_chunks
        ),
        out_shape=jax.ShapeDtypeStruct((rows, w), x_flat.dtype),
        in_specs=[pl.BlockSpec(memory_space=pl.ANY)],
        out_specs=pl.BlockSpec(memory_space=pl.ANY),
        scratch_shapes=[pltpu.SemaphoreType.DMA((num_chunks,))],
        cost_estimate=pl.CostEstimate(
            flops=0, transcendentals=0, bytes_accessed=2 * total_bytes
        ),
    )(x_flat)

    # Final reshape to the requested target shape (metadata only).
    return out_flat.reshape((bs,) + size)


if __name__ == "__main__":
    key = jax.random.PRNGKey(0)

    # NCHW input, as the PyTorch reference would receive.
    x = jax.random.normal(key, (2, 4, 16, 16), dtype=jnp.float32)

    # Channel([4, 256]): reshape each sample's 4*16*16 = 1024 elements.
    size = (4, 256)

    # Reference computed up-front on the host.
    ref = np.asarray(x).reshape((x.shape[0],) + size)

    # Pallas path (flat HBM->HBM DMA memcpy).
    out = channel_forward(x, size)
    out = jax.block_until_ready(out)
    assert out.shape == (x.shape[0],) + size, out.shape
    assert out.dtype == x.dtype
    np.testing.assert_array_equal(np.asarray(out), ref)

    # Preferred metadata-only path (review item #1): free reshape, no kernel.
    out2 = jax.block_until_ready(channel_reshape(x, size))
    np.testing.assert_array_equal(np.asarray(out2), ref)

    print("KERNEL_OK")
</pallas_src>

<mosaic_0001>
module attributes {stable_mosaic.version = 11 : i64} {
  func.func @_memcpy_kernel(%arg0: memref<8x256xf32, #tpu.memory_space<any>>, %arg1: memref<8x256xf32, #tpu.memory_space<any>>, %arg2: memref<1x!tpu.dma_semaphore, #tpu.memory_space<semaphore_mem>>) attributes {dimension_semantics = [], scalar_prefetch = 0 : i64, scratch_operands = 1 : i64, tpu.core_type = #tpu.core_type<tc>} {
    %c0_i32 = arith.constant 0 : i32
    %c0_i32_0 = arith.constant 0 : i32
    %c0_i32_1 = arith.constant 0 : i32
    %0 = tpu.memref_slice %arg0[%c0_i32_0, %c0_i32_1] : memref<8x256xf32, #tpu.memory_space<any>> -> memref<8x256xf32, #tpu.memory_space<any>>
    %c0_i32_2 = arith.constant 0 : i32
    %c0_i32_3 = arith.constant 0 : i32
    %1 = tpu.memref_slice %arg1[%c0_i32_2, %c0_i32_3] : memref<8x256xf32, #tpu.memory_space<any>> -> memref<8x256xf32, #tpu.memory_space<any>>
    %2 = tpu.memref_slice %arg2[%c0_i32] : memref<1x!tpu.dma_semaphore, #tpu.memory_space<semaphore_mem>> -> memref<1x!tpu.dma_semaphore, #tpu.memory_space<semaphore_mem>>
    %3 = tpu.memref_squeeze %2 : memref<1x!tpu.dma_semaphore, #tpu.memory_space<semaphore_mem>> -> memref<!tpu.dma_semaphore, #tpu.memory_space<semaphore_mem>>
    tpu.enqueue_dma source(%0 : memref<8x256xf32, #tpu.memory_space<any>>) target(%1 : memref<8x256xf32, #tpu.memory_space<any>>) target_semaphore(%3 : memref<!tpu.dma_semaphore, #tpu.memory_space<semaphore_mem>>)
    %c0_i32_4 = arith.constant 0 : i32
    %c0_i32_5 = arith.constant 0 : i32
    %c0_i32_6 = arith.constant 0 : i32
    %4 = tpu.memref_slice %arg0[%c0_i32_5, %c0_i32_6] : memref<8x256xf32, #tpu.memory_space<any>> -> memref<8x256xf32, #tpu.memory_space<any>>
    %c0_i32_7 = arith.constant 0 : i32
    %c0_i32_8 = arith.constant 0 : i32
    %5 = tpu.memref_slice %arg1[%c0_i32_7, %c0_i32_8] : memref<8x256xf32, #tpu.memory_space<any>> -> memref<8x256xf32, #tpu.memory_space<any>>
    %6 = tpu.memref_slice %arg2[%c0_i32_4] : memref<1x!tpu.dma_semaphore, #tpu.memory_space<semaphore_mem>> -> memref<1x!tpu.dma_semaphore, #tpu.memory_space<semaphore_mem>>
    %7 = tpu.memref_squeeze %6 : memref<1x!tpu.dma_semaphore, #tpu.memory_space<semaphore_mem>> -> memref<!tpu.dma_semaphore, #tpu.memory_space<semaphore_mem>>
    tpu.wait_dma2 semaphore(%7 : memref<!tpu.dma_semaphore, #tpu.memory_space<semaphore_mem>>) src(%4 : memref<8x256xf32, #tpu.memory_space<any>>) dst(%5 : memref<8x256xf32, #tpu.memory_space<any>>)
    return
  }
}

</mosaic_0001>

<llo_original>
// kernel: channel_forward.1
$region0: #{channel_forward.1}
  #allocation0 [shape = 'u32[]', space=smem, size = 0x4, offset = 0x4, fixed_abs, tag = 'smem constant byte address 0x4 - core index']
  #allocation1 [shape = 'u32[144,128]{1,0:T(1,128)}', space=vmem, size = 0x12000, scoped, tag = 'internal scratch']
  #allocation2 [shape = 's32[1]{0}', space=sflag, size = 0x4, scoped, tag = 'scratch operand']
  #allocation3 [shape = 's32[]', space=sflag, size = 0x4, offset = 0, fixed_abs, tag = 'sflag constant byte address 0x0 - dummy sync flag']
  %s0 = inlined_call_operand.vmem [shape: f32[8,256], index: 0, kind: input, shape index: {}]
  %s1 = inlined_call_operand.vmem [shape: f32[8,256], index: 1, kind: output, shape index: {}]
  %s2 = sld [smem:[#allocation0]]
  $region36: #{channel_forward.1} parent=0
    _
  %s4 = ssub.s32 1, %s2
  %s5 = scalar_select 0, %s4, %s2
  %p7 = scmp.lt.u32.totalorder 16, 8
  %p8 = pneg %p7
  // Predicated region
  $region2: #{channel_forward.1} parent=0 // pred_check
    _
  $region3: #{channel_forward.1} parent=0 // pred_check_branch
    %10 = sbr.rel (%p7) target = $region5
  $region4: #{channel_forward.1} parent=0 // pred_region
    %s25 = sand.u32 16, 7
    %p26 = scmp.eq.s32.totalorder %s25, 0
    // Predicated region
    $region17: #{channel_forward.1} parent=4 // pred_check
      %p27 = pneg %p26
    $region18: #{channel_forward.1} parent=4 // pred_check_branch
      %29 = sbr.rel (%p27) target = $region20
    $region19: #{channel_forward.1} parent=4 // pred_region
      loop: start=0, step=1, limit=1
      $region21: #{channel_forward.1} parent=19 // loop_pre_header
        _
      $region22: #{channel_forward.1} parent=19 // loop_header
        %s31 = sphi 0, %s35
        %p32 = scmp.ge.s32.totalorder %s31, 1
        %s36 = sphi %s0, %s0
        %s37 = sphi %s1, %s1
      $region23: #{channel_forward.1} parent=19 // loop_header_branch
        %34 = sbr.rel (%p32) target = $region27
      $region24: #{channel_forward.1} parent=19 // loop_body
        %v38 = vld [vmem:[%s36] sm:$0xff]
        %39 = vst [vmem:[%s37] sm:$0xff] %v38
        %v40 = vld [vmem:[%s36 + $0x8] sm:$0xff]
        %41 = vst [vmem:[%s37 + $0x8] sm:$0xff] %v40
      $region25: #{channel_forward.1} parent=19 // loop_footer
        %s35 = sadd.s32 1, %s31
      $region26: #{channel_forward.1} parent=19 // loop_footer_branch
        %30 = sbr.rel target = $region22
      $region27: #{channel_forward.1} parent=19 // loop_exit
        _
    $region20: #{channel_forward.1} parent=4 // pred_fallthru
      _
    %p42 = pneg %p26
    // Predicated region
    $region28: #{channel_forward.1} parent=4 // pred_check
      _
    $region29: #{channel_forward.1} parent=4 // pred_check_branch
      %44 = sbr.rel (%p26) target = $region31
    $region30: #{channel_forward.1} parent=4 // pred_region
      %s45 = sand.u32 16, 7
    $region31: #{channel_forward.1} parent=4 // pred_fallthru
      _
  $region5: #{channel_forward.1} parent=0 // pred_fallthru
    _
  // Predicated region
  $region6: #{channel_forward.1} parent=0 // pred_check
    %p11 = pneg %p7
  $region7: #{channel_forward.1} parent=0 // pred_check_branch
    %13 = sbr.rel (%p11) target = $region9
  $region8: #{channel_forward.1} parent=0 // pred_region
    %s14 = sshllo.u32 0, 16
    loop: start=0, step=1, limit=1
    $region10: #{channel_forward.1} parent=8 // loop_pre_header
      _
    $region11: #{channel_forward.1} parent=8 // loop_header
      %s16 = sphi 0, %s20
      %p17 = scmp.ge.s32.totalorder %s16, 1
      %s21 = sphi %s0, %s0
      %s22 = sphi %s1, %s1
    $region12: #{channel_forward.1} parent=8 // loop_header_branch
      %19 = sbr.rel (%p17) target = $region16
    $region13: #{channel_forward.1} parent=8 // loop_body
      %v23 = vld [vmem:[%s21] sm:%s14]
      %24 = vst [vmem:[%s22] sm:%s14] %v23
    $region14: #{channel_forward.1} parent=8 // loop_footer
      %s20 = sadd.s32 1, %s16
    $region15: #{channel_forward.1} parent=8 // loop_footer_branch
      %15 = sbr.rel target = $region11
    $region16: #{channel_forward.1} parent=8 // loop_exit
      _
  $region9: #{channel_forward.1} parent=0 // pred_fallthru
    _
  // Predicated region
  $region32: #{channel_forward.1} parent=0 // pred_check
    _
  $region33: #{channel_forward.1} parent=0 // pred_check_branch
    %48 = sbr.rel (0) target = $region35
  $region34: #{channel_forward.1} parent=0 // pred_region
    %49 = vsyncadd [#allocation2], 256
  $region35: #{channel_forward.1} parent=0 // pred_fallthru
    _
  %s50 = smul.u32 8, 1
  %s51 = smul.u32 %s50, 2
  %s52 = sshll.u32 %s51, 4
  %53 = dma.done [#allocation2], %s52
  %54 = vsyncmov [#allocation2]
  %s55 = vpop.sfrf %54
  %p56 = scmp.eq.s32.totalorder %s55, 0
  %p57 = pneg %p56
  %59 = shalt.err (%p57)

</llo_original>
